<compile_context>
chip_gen: v7x
topology: tpu7x:2x2x1
jax: 0.10.0
libtpu: 0.0.40
codegen_flags: <defaults>
</compile_context>

<pallas_src>
import functools
import math

import jax
import jax.numpy as jnp
from jax.experimental import pallas as pl
from jax.experimental.pallas import tpu as pltpu


def _round_up(a: int, b: int) -> int:
    return (a + b - 1) // b * b


def patch_embed_kernel(p_ref, w_ref, prm_ref, seg_ref, o_ref):
    """Fused (patches @ W + b) -> LayerNorm in a lane-dense layout.

      p_ref   (TMd, G*K)   G row-groups of flattened patches per dense row
      w_ref   (G*K, G*E)   block-diagonal projection weight (G copies of (K,E))
      prm_ref (3,   G*E)   row 0 bias, row 1 gamma, row 2 beta (each tiled G x)
      seg_ref (G*E, G*E)   segmented averaging matrix: 1/E within each E group
      o_ref   (TMd, G*E)   lanes [g*E:(g+1)*E] of dense row r = patch r*G + g
    """
    prm = prm_ref[...]
    seg = seg_ref[...]
    y = jnp.dot(p_ref[...], w_ref[...], preferred_element_type=jnp.float32)
    y = y + prm[0:1, :]                                    # conv bias
    # LayerNorm over each E-wide lane segment.  Segment mean/var are computed
    # with matmuls so the data never leaves the lane-dense layout.
    mean = jnp.dot(y, seg, preferred_element_type=jnp.float32)
    cent = y - mean
    var = jnp.dot(cent * cent, seg, preferred_element_type=jnp.float32)
    xhat = cent * jax.lax.rsqrt(var + 1e-5)                # torch LN eps
    o_ref[...] = (xhat * prm[1:2, :] + prm[2:3, :]).astype(o_ref.dtype)


def _vmem_limit_bytes() -> int:
    # More headroom than the 16/32 MiB scoped default, but well under physical
    # VMEM (128 MiB v5e/v6e, 64 MiB v7x).
    try:
        cap = pltpu.get_tpu_info().vmem_capacity_bytes
    except Exception:
        cap = 64 * 1024 * 1024
    return int(min(cap * 3 // 4, 96 * 1024 * 1024))


@functools.partial(jax.jit, static_argnames=("patch_size", "tm_max"))
def patch_embedding(x, w, b, gamma, beta, *, patch_size, tm_max=512):
    """x: (B, C, H, W) NCHW.  Returns ((B, num_patches, E), (Hp, Wp))."""
    B, C, H, W = x.shape
    p = patch_size
    Hp, Wp = H // p, W // p
    E = w.shape[0]
    K = C * p * p
    N = B * Hp * Wp

    # Lane-dense grouping: pack G consecutive patches per output row so the
    # output row width G*E is a multiple of 128 lanes when E < 128.
    G = 128 // math.gcd(E, 128)
    if G * E > 512:          # awkward embed dims: fall back to plain layout
        G = 1

    # Row tile: as large as useful (per-grid-step overhead ~0.35us), aligned to
    # 8*G so the dense block's sublane dim stays a multiple of 8, never larger
    # than the padded problem.  No divisibility assert: N is padded instead.
    tile = 8 * G
    tm = max(tile, min(_round_up(N, tile), (tm_max // tile) * tile))
    Npad = _round_up(N, tm)
    num_tiles = Npad // tm
    tm_d = tm // G

    # ---- layout glue: extract non-overlapping patches, flattened in
    # (C, ph, pw) order to match nn.Conv2d's (out, in, kh, kw) weights.
    # allow_input_fusion lets XLA fold this transpose/pad into the kernel's
    # input DMA instead of materializing `patches` in HBM.
    patches = x.reshape(B, C, Hp, p, Wp, p)
    patches = patches.transpose(0, 2, 4, 1, 3, 5).reshape(N, K)
    if Npad != N:
        patches = jnp.pad(patches, ((0, Npad - N), (0, 0)))
    patches_d = patches.reshape(Npad // G, G * K)          # free reshape

    # Parameters (tiny).  Block-diagonal weight = G independent per-patch
    # projections in one lane-dense matmul.
    w_mat = w.reshape(E, K).T.astype(x.dtype)              # (K, E)
    w_bd = w_mat if G == 1 else jnp.kron(jnp.eye(G, dtype=w_mat.dtype), w_mat)
    prm = jnp.stack([jnp.tile(b, G), jnp.tile(gamma, G), jnp.tile(beta, G)]
                    ).astype(jnp.float32)                  # (3, G*E)
    seg = jnp.kron(jnp.eye(G, dtype=jnp.float32),
                   jnp.full((E, E), 1.0 / E, jnp.float32))  # (G*E, G*E)

    patches_spec = pl.BlockSpec((tm_d, G * K), lambda i: (i, 0))
    if num_tiles >= 3:
        # Deeper buffering on the single streaming input (hides HBM latency,
        # esp. v6e); weight/param blocks are resident -> default depth.
        patches_spec = pl.BlockSpec((tm_d, G * K), lambda i: (i, 0),
                                    pipeline_mode=pl.Buffered(3))

    out_dense = pl.pallas_call(
        patch_embed_kernel,
        out_shape=jax.ShapeDtypeStruct((Npad // G, G * E), x.dtype),
        grid_spec=pltpu.PrefetchScalarGridSpec(
            num_scalar_prefetch=0,
            grid=(num_tiles,),
            in_specs=[
                patches_spec,
                pl.BlockSpec((G * K, G * E), lambda i: (0, 0)),
                pl.BlockSpec((3, G * E), lambda i: (0, 0)),
                pl.BlockSpec((G * E, G * E), lambda i: (0, 0)),
            ],
            out_specs=pl.BlockSpec((tm_d, G * E), lambda i: (i, 0)),
        ),
        compiler_params=pltpu.CompilerParams(
            dimension_semantics=("parallel",),   # row tiles shard across TCs
            vmem_limit_bytes=_vmem_limit_bytes(),
            allow_input_fusion=[True, False, False, False],
        ),
    )(patches_d, w_bd, prm, seg)

    # (Npad//G, G*E) -> (Npad, E) is a contiguous (free) reshape.
    out = out_dense.reshape(Npad, E)[:N].reshape(B, Hp * Wp, E)
    return out, (Hp, Wp)


def reference(x, w, b, gamma, beta, patch_size):
    """Pure-JAX reference mirroring the PyTorch forward."""
    y = jax.lax.conv_general_dilated(
        x, w, window_strides=(patch_size, patch_size), padding="VALID",
        dimension_numbers=("NCHW", "OIHW", "NCHW"))
    y = y + b[None, :, None, None]
    B, C, H, W = y.shape
    y = y.reshape(B, C, H * W).transpose(0, 2, 1)            # (B, Np, E)
    mean = jnp.mean(y, axis=-1, keepdims=True)
    var = jnp.mean((y - mean) ** 2, axis=-1, keepdims=True)
    y = (y - mean) / jnp.sqrt(var + 1e-5)
    return y * gamma + beta, (H, W)


if __name__ == "__main__":
    # Small forward-consistent shapes: B=2, in_chans=4, H=W=16, patch_size=4
    # -> 4x4 patches per image, embed_dim=32 (exercises the lane-dense G=4 path).
    B, C, H, W = 2, 4, 16, 16
    patch_size = 4
    embed_dim = 32

    key = jax.random.PRNGKey(0)
    kx, kw, kb, kg, kbe, kx2 = jax.random.split(key, 6)
    x = jax.random.normal(kx, (B, C, H, W), dtype=jnp.float32)
    w = jax.random.normal(kw, (embed_dim, C, patch_size, patch_size),
                          dtype=jnp.float32) * 0.05
    b = jax.random.normal(kb, (embed_dim,), dtype=jnp.float32) * 0.05
    gamma = 1.0 + 0.1 * jax.random.normal(kg, (embed_dim,), dtype=jnp.float32)
    beta = 0.1 * jax.random.normal(kbe, (embed_dim,), dtype=jnp.float32)

    out, (Hp, Wp) = patch_embedding(x, w, b, gamma, beta, patch_size=patch_size)
    out = jax.block_until_ready(out)
    ref, (Hr, Wr) = reference(x, w, b, gamma, beta, patch_size)
    assert out.shape == (B, (H // patch_size) * (W // patch_size), embed_dim)
    assert (Hp, Wp) == (Hr, Wr)
    assert jnp.allclose(out, ref, atol=1e-4, rtol=1e-4)

    # Ragged patch count (N=48 < row tile) exercises the padding path that
    # replaced the old hard divisibility assert.
    x2 = jax.random.normal(kx2, (3, C, H, W), dtype=jnp.float32)
    out2, _ = patch_embedding(x2, w, b, gamma, beta, patch_size=patch_size)
    out2 = jax.block_until_ready(out2)
    ref2, _ = reference(x2, w, b, gamma, beta, patch_size)
    assert jnp.allclose(out2, ref2, atol=1e-4, rtol=1e-4)

    print("KERNEL_OK")
</pallas_src>

<mosaic_0001>
module attributes {stable_mosaic.version = 11 : i64} {
  func.func @patch_embed_kernel(%arg0: i32, %arg1: memref<8x256xf32, #tpu.memory_space<vmem>>, %arg2: memref<256x128xf32, #tpu.memory_space<vmem>>, %arg3: memref<3x128xf32, #tpu.memory_space<vmem>>, %arg4: memref<128x128xf32, #tpu.memory_space<vmem>>, %arg5: memref<8x128xf32, #tpu.memory_space<vmem>>) attributes {dimension_semantics = [#tpu.dimension_semantics<parallel>], iteration_bounds = array<i64: 1>, scalar_prefetch = 0 : i64, scratch_operands = 0 : i64, tpu.core_type = #tpu.core_type<tc>, window_params = [{transform_indices = @transform_0, window_bounds = array<i64: 8, 256>}, {pipeline_mode = #tpu.pipeline_mode<synchronous>, transform_indices = @transform_1, window_bounds = array<i64: 256, 128>}, {pipeline_mode = #tpu.pipeline_mode<synchronous>, transform_indices = @transform_2, window_bounds = array<i64: 3, 128>}, {pipeline_mode = #tpu.pipeline_mode<synchronous>, transform_indices = @transform_3, window_bounds = array<i64: 128, 128>}, {transform_indices = @transform_4, window_bounds = array<i64: 8, 128>}]} {
    %c0 = arith.constant 0 : index
    %c0_0 = arith.constant 0 : index
    %0 = vector.load %arg3[%c0, %c0_0] : memref<3x128xf32, #tpu.memory_space<vmem>>, vector<3x128xf32>
    %c0_1 = arith.constant 0 : index
    %c0_2 = arith.constant 0 : index
    %1 = vector.load %arg4[%c0_1, %c0_2] : memref<128x128xf32, #tpu.memory_space<vmem>>, vector<128x128xf32>
    %c0_3 = arith.constant 0 : index
    %c0_4 = arith.constant 0 : index
    %2 = vector.load %arg1[%c0_3, %c0_4] : memref<8x256xf32, #tpu.memory_space<vmem>>, vector<8x256xf32>
    %c0_5 = arith.constant 0 : index
    %c0_6 = arith.constant 0 : index
    %3 = vector.load %arg2[%c0_5, %c0_6] : memref<256x128xf32, #tpu.memory_space<vmem>>, vector<256x128xf32>
    %cst = arith.constant dense<0.000000e+00> : vector<8x128xf32>
    %4 = tpu.matmul %2, %3, %cst {dimension_numbers = #tpu.dot_dimension_numbers<[1], [0], [0], [1], [0, 0, 1, 1], [], []>} : vector<8x256xf32>, vector<256x128xf32>, vector<8x128xf32> -> vector<8x128xf32>
    %5 = vector.extract_strided_slice %0 {offsets = [0, 0], sizes = [1, 128], strides = [1, 1]} : vector<3x128xf32> to vector<1x128xf32>
    %6 = vector.broadcast %5 : vector<1x128xf32> to vector<8x128xf32>
    %7 = arith.addf %4, %6 : vector<8x128xf32>
    %cst_7 = arith.constant dense<0.000000e+00> : vector<8x128xf32>
    %8 = tpu.matmul %7, %1, %cst_7 {dimension_numbers = #tpu.dot_dimension_numbers<[1], [0], [0], [1], [0, 0, 1, 1], [], []>} : vector<8x128xf32>, vector<128x128xf32>, vector<8x128xf32> -> vector<8x128xf32>
    %9 = arith.subf %7, %8 : vector<8x128xf32>
    %10 = arith.mulf %9, %9 : vector<8x128xf32>
    %cst_8 = arith.constant dense<0.000000e+00> : vector<8x128xf32>
    %11 = tpu.matmul %10, %1, %cst_8 {dimension_numbers = #tpu.dot_dimension_numbers<[1], [0], [0], [1], [0, 0, 1, 1], [], []>} : vector<8x128xf32>, vector<128x128xf32>, vector<8x128xf32> -> vector<8x128xf32>
    %cst_9 = arith.constant 9.99999974E-6 : f32
    %12 = vector.broadcast %cst_9 : f32 to vector<8x128xf32>
    %13 = arith.addf %11, %12 : vector<8x128xf32>
    %14 = math.rsqrt %13 : vector<8x128xf32>
    %15 = arith.mulf %9, %14 : vector<8x128xf32>
    %16 = vector.extract_strided_slice %0 {offsets = [1, 0], sizes = [1, 128], strides = [1, 1]} : vector<3x128xf32> to vector<1x128xf32>
    %17 = vector.broadcast %16 : vector<1x128xf32> to vector<8x128xf32>
    %18 = arith.mulf %15, %17 : vector<8x128xf32>
    %19 = vector.extract_strided_slice %0 {offsets = [2, 0], sizes = [1, 128], strides = [1, 1]} : vector<3x128xf32> to vector<1x128xf32>
    %20 = vector.broadcast %19 : vector<1x128xf32> to vector<8x128xf32>
    %21 = arith.addf %18, %20 : vector<8x128xf32>
    %c0_10 = arith.constant 0 : index
    %c0_11 = arith.constant 0 : index
    %22 = vector.load %arg5[%c0_10, %c0_11] : memref<8x128xf32, #tpu.memory_space<vmem>>, vector<8x128xf32>
    tpu.vector_store %arg5[%c0_10, %c0_11], %21 {strides = array<i32>} : memref<8x128xf32, #tpu.memory_space<vmem>>, vector<8x128xf32>,
    return
  }
  func.func @transform_0(%arg0: i32) -> (i32, i32) {
    %c0_i32 = arith.constant 0 : i32
    %c0_i32_0 = arith.constant 0 : i32
    return %arg0, %c0_i32 : i32, i32
  }
  func.func @transform_1(%arg0: i32) -> (i32, i32) {
    %c0_i32 = arith.constant 0 : i32
    %c0_i32_0 = arith.constant 0 : i32
    %c0_i32_1 = arith.constant 0 : i32
    return %c0_i32, %c0_i32_0 : i32, i32
  }
  func.func @transform_2(%arg0: i32) -> (i32, i32) {
    %c0_i32 = arith.constant 0 : i32
    %c0_i32_0 = arith.constant 0 : i32
    %c0_i32_1 = arith.constant 0 : i32
    return %c0_i32, %c0_i32_0 : i32, i32
  }
  func.func @transform_3(%arg0: i32) -> (i32, i32) {
    %c0_i32 = arith.constant 0 : i32
    %c0_i32_0 = arith.constant 0 : i32
    %c0_i32_1 = arith.constant 0 : i32
    return %c0_i32, %c0_i32_0 : i32, i32
  }
  func.func @transform_4(%arg0: i32) -> (i32, i32) {
    %c0_i32 = arith.constant 0 : i32
    %c0_i32_0 = arith.constant 0 : i32
    return %arg0, %c0_i32 : i32, i32
  }
}

</mosaic_0001>

<llo_original>
// kernel: tile.26
$region0: #{tile.26}
  #allocation0 [shape = 's32[1]{0}', space=sflag, size = 0x4, scoped, tag = 'scoped memory for tile.26']
  %s0 = inlined_call_operand.vmem [shape: f32[32], index: 0, kind: input, shape index: {}]
  %s1 = inlined_call_operand.vmem [shape: f32[4,32], index: 1, kind: output, shape index: {}]
  // Predicated region
  $region2: #{tile.26} parent=0 // pred_check
    _
  $region3: #{tile.26} parent=0 // pred_check_branch
    %3 = sbr.rel (0) target = $region5
  $region4: #{tile.26} parent=0 // pred_region
    _
  $region5: #{tile.26} parent=0 // pred_fallthru
    _
  %v4 = vld [vmem:[%s0] ss:$0 sm:$0xff]
  %5 = vst [vmem:[%s1] sm:$0xf] %v4

// kernel: tile.29
$region0: #{tile.29}
  %s0 = inlined_call_operand.vmem [shape: f32[4,32], index: 0, kind: input, shape index: {}]
  %s1 = inlined_call_operand.vmem [shape: f32[1,128], index: 1, kind: output, shape index: {}]
  $region1: #{tile.29} parent=0
    #allocation0 [shape = 'u8[4096]{0}', space=vmem, size = 0x1000, scoped, tag = 'scoped mem for output reshape']
    #allocation1 [shape = 'u8[4096]{0}', space=vmem, size = 0x1000, scoped, tag = 'scoped mem for input reshape']
    %s3 = sshllo.u32 0, 4
    %v4 = vld [vmem:[%s0] sm:%s3]
    %5 = vst [vmem:[#allocation1] sm:%s3] %v4
    %v6 = vld [vmem:[#allocation1] sm:$0x1]
    %vm7 = vcmask 261120
    %8 = vst.msk [vmem:[#allocation0] sm:$0x1] %vm7, %v6
    %s9 = scalar_lea.vmem [#allocation1], 3
    %v10 = vld [vmem:[%s9] sm:$0x1]
    %11 = vrot.lane.b32.xlu0 %v10, 96
    %v12 = vpop.permute.xlu0 %11
    %vm13 = vcmask 1048320
    %14 = vst.msk [vmem:[#allocation0] sm:$0x1] %vm13, %v12
    %s15 = scalar_lea.vmem [#allocation1], 2
    %v16 = vld [vmem:[%s15] sm:$0x1]
    %17 = vrot.lane.b32.xlu0 %v16, 64
    %v18 = vpop.permute.xlu0 %17
    %vm19 = vcmask 785920
    %20 = vst.msk [vmem:[#allocation0] sm:$0x1] %vm19, %v18
    %s21 = scalar_lea.vmem [#allocation1], 1
    %v22 = vld [vmem:[%s21] sm:$0x1]
    %23 = vrot.lane.b32.xlu0 %v22, 32
    %v24 = vpop.permute.xlu0 %23
    %vm25 = vcmask 523520
    %26 = vst.msk [vmem:[#allocation0] sm:$0x1] %vm25, %v24
    %s28 = sshllo.u32 0, 1
    %v30 = vld [vmem:[#allocation0] sm:%s28]
    %s31 = sshllo.u32 0, 1
    %32 = vst [vmem:[%s1] sm:%s31] %v30

// kernel: patch_embedding.1
$region0: #{patch_embedding.1}
  #allocation0 [shape = 'u32[]', space=smem, size = 0x4, offset = 0x4, fixed_abs, tag = 'smem constant byte address 0x4 - core index']
  #allocation1 [shape = 'u32[144,128]{1,0:T(1,128)}', space=vmem, size = 0x12000, scoped, tag = 'internal scratch']
  %s0 = inlined_call_operand.vmem [shape: f32[8,256], index: 0, kind: input, shape index: {}]
  %s1 = inlined_call_operand.vmem [shape: f32[256,128], index: 1, kind: input, shape index: {}]
  %s2 = inlined_call_operand.vmem [shape: f32[3,128], index: 2, kind: input, shape index: {}]
  %s3 = inlined_call_operand.vmem [shape: f32[128,128], index: 3, kind: input, shape index: {}]
  %s4 = inlined_call_operand.vmem [shape: f32[8,128], index: 4, kind: output, shape index: {}]
  %s5 = sld [smem:[#allocation0]]
  $region26: #{patch_embedding.1} parent=0
    _
  %s7 = ssub.s32 1, %s5
  %s8 = scalar_select 0, %s7, %s5
  // Predicated region
  $region2: #{patch_embedding.1} parent=0 // pred_check
    _
  $region3: #{patch_embedding.1} parent=0 // pred_check_branch
    %10 = sbr.rel (0) target = $region5
  $region4: #{patch_embedding.1} parent=0 // pred_region
    _
  $region5: #{patch_embedding.1} parent=0 // pred_fallthru
    _
  // Predicated region
  $region6: #{patch_embedding.1} parent=0 // pred_check
    _
  $region7: #{patch_embedding.1} parent=0 // pred_check_branch
    %12 = sbr.rel (0) target = $region9
  $region8: #{patch_embedding.1} parent=0 // pred_region
    _
  $region9: #{patch_embedding.1} parent=0 // pred_fallthru
    _
  // Predicated region
  $region10: #{patch_embedding.1} parent=0 // pred_check
    _
  $region11: #{patch_embedding.1} parent=0 // pred_check_branch
    %14 = sbr.rel (0) target = $region13
  $region12: #{patch_embedding.1} parent=0 // pred_region
    _
  $region13: #{patch_embedding.1} parent=0 // pred_fallthru
    _
  // Predicated region
  $region14: #{patch_embedding.1} parent=0 // pred_check
    _
  $region15: #{patch_embedding.1} parent=0 // pred_check_branch
    %16 = sbr.rel (0) target = $region17
  $region16: #{patch_embedding.1} parent=0 // pred_region
    _
  $region17: #{patch_embedding.1} parent=0 // pred_fallthru
    _
  %v17 = vld [vmem:[%s2] sm:$0x7]
  %v18 = vld [vmem:[%s3] sm:$0xff]
  %v19 = vld [vmem:[%s3 + $0x8] sm:$0xff]
  %v20 = vld [vmem:[%s3 + $0x10] sm:$0xff]
  %v21 = vld [vmem:[%s3 + $0x18] sm:$0xff]
  %v22 = vld [vmem:[%s3 + $0x20] sm:$0xff]
  %v23 = vld [vmem:[%s3 + $0x28] sm:$0xff]
  %v24 = vld [vmem:[%s3 + $0x30] sm:$0xff]
  %v25 = vld [vmem:[%s3 + $0x38] sm:$0xff]
  %v26 = vld [vmem:[%s3 + $0x40] sm:$0xff]
  %v27 = vld [vmem:[%s3 + $0x48] sm:$0xff]
  %v28 = vld [vmem:[%s3 + $0x50] sm:$0xff]
  %v29 = vld [vmem:[%s3 + $0x58] sm:$0xff]
  %v30 = vld [vmem:[%s3 + $0x60] sm:$0xff]
  %v31 = vld [vmem:[%s3 + $0x68] sm:$0xff]
  %v32 = vld [vmem:[%s3 + $0x70] sm:$0xff]
  %v33 = vld [vmem:[%s3 + $0x78] sm:$0xff]
  %v34 = vld [vmem:[%s0] sm:$0xff]
  %v35 = vld [vmem:[%s0 + $0x8] sm:$0xff]
  %v36 = vld [vmem:[%s1] sm:$0xff]
  %v37 = vld [vmem:[%s1 + $0x8] sm:$0xff]
  %v38 = vld [vmem:[%s1 + $0x10] sm:$0xff]
  %v39 = vld [vmem:[%s1 + $0x18] sm:$0xff]
  %v40 = vld [vmem:[%s1 + $0x20] sm:$0xff]
  %v41 = vld [vmem:[%s1 + $0x28] sm:$0xff]
  %v42 = vld [vmem:[%s1 + $0x30] sm:$0xff]
  %v43 = vld [vmem:[%s1 + $0x38] sm:$0xff]
  %v44 = vld [vmem:[%s1 + $0x40] sm:$0xff]
  %v45 = vld [vmem:[%s1 + $0x48] sm:$0xff]
  %v46 = vld [vmem:[%s1 + $0x50] sm:$0xff]
  %v47 = vld [vmem:[%s1 + $0x58] sm:$0xff]
  %v48 = vld [vmem:[%s1 + $0x60] sm:$0xff]
  %v49 = vld [vmem:[%s1 + $0x68] sm:$0xff]
  %v50 = vld [vmem:[%s1 + $0x70] sm:$0xff]
  %v51 = vld [vmem:[%s1 + $0x78] sm:$0xff]
  %v52 = vld [vmem:[%s1 + $0x80] sm:$0xff]
  %v53 = vld [vmem:[%s1 + $0x88] sm:$0xff]
  %v54 = vld [vmem:[%s1 + $0x90] sm:$0xff]
  %v55 = vld [vmem:[%s1 + $0x98] sm:$0xff]
  %v56 = vld [vmem:[%s1 + $0xa0] sm:$0xff]
  %v57 = vld [vmem:[%s1 + $0xa8] sm:$0xff]
  %v58 = vld [vmem:[%s1 + $0xb0] sm:$0xff]
  %v59 = vld [vmem:[%s1 + $0xb8] sm:$0xff]
  %v60 = vld [vmem:[%s1 + $0xc0] sm:$0xff]
  %v61 = vld [vmem:[%s1 + $0xc8] sm:$0xff]
  %v62 = vld [vmem:[%s1 + $0xd0] sm:$0xff]
  %v63 = vld [vmem:[%s1 + $0xd8] sm:$0xff]
  %v64 = vld [vmem:[%s1 + $0xe0] sm:$0xff]
  %v65 = vld [vmem:[%s1 + $0xe8] sm:$0xff]
  %v66 = vld [vmem:[%s1 + $0xf0] sm:$0xff]
  %v67 = vld [vmem:[%s1 + $0xf8] sm:$0xff]
  %v68 = vlaneseq
  %v69 = vshrl.u32 %v68, 7
  %v70 = vsub.s32 0, %v69
  %v71 = vrot.slane %v17, %v70
  %72 = vmatprep.subr.mxu0 0.0
  %73 = vmatpush1.msra.mxu0 %v36
  %74 = vmatprep.subr.mxu0 0.0
  %75 = vmatpush1.msra.mxu0 %v37
  %76 = vmatprep.subr.mxu0 0.0
  %77 = vmatpush1.msra.mxu0 %v38
  %78 = vmatprep.subr.mxu0 0.0
  %79 = vmatpush1.msra.mxu0 %v39
  %80 = vmatprep.subr.mxu0 0.0
  %81 = vmatpush1.msra.mxu0 %v40
  %82 = vmatprep.subr.mxu0 0.0
  %83 = vmatpush1.msra.mxu0 %v41
  %84 = vmatprep.subr.mxu0 0.0
  %85 = vmatpush1.msra.mxu0 %v42
  %86 = vmatprep.subr.mxu0 0.0
  %87 = vmatpush1.msra.mxu0 %v43
  %88 = vmatprep.subr.mxu0 0.0
  %89 = vmatpush1.msra.mxu0 %v44
  %90 = vmatprep.subr.mxu0 0.0
  %91 = vmatpush1.msra.mxu0 %v45
  %92 = vmatprep.subr.mxu0 0.0
  %93 = vmatpush1.msra.mxu0 %v46
  %94 = vmatprep.subr.mxu0 0.0
  %95 = vmatpush1.msra.mxu0 %v47
  %96 = vmatprep.subr.mxu0 0.0
  %97 = vmatpush1.msra.mxu0 %v48
  %98 = vmatprep.subr.mxu0 0.0
  %99 = vmatpush1.msra.mxu0 %v49
  %100 = vmatprep.subr.mxu0 0.0
  %101 = vmatpush1.msra.mxu0 %v50
  %102 = vmatprep.subr.mxu0 0.0
  %103 = vmatpush1.msra.mxu0 %v51
  %104 = vmatprep.subr.mxu0 0.0
  %105 = vmatpush1.msra.mxu0 %v52
  %106 = vmatprep.subr.mxu0 0.0
  %107 = vmatpush1.msra.mxu0 %v53
  %108 = vmatprep.subr.mxu0 0.0
  %109 = vmatpush1.msra.mxu0 %v54
  %110 = vmatprep.subr.mxu0 0.0
  %111 = vmatpush1.msra.mxu0 %v55
  %112 = vmatprep.subr.mxu0 0.0
  %113 = vmatpush1.msra.mxu0 %v56
  %114 = vmatprep.subr.mxu0 0.0
  %115 = vmatpush1.msra.mxu0 %v57
  %116 = vmatprep.subr.mxu0 0.0
  %117 = vmatpush1.msra.mxu0 %v58
  %118 = vmatprep.subr.mxu0 0.0
  %119 = vmatpush1.msra.mxu0 %v59
  %120 = vmatprep.subr.mxu0 0.0
  %121 = vmatpush1.msra.mxu0 %v60
  %122 = vmatprep.subr.mxu0 0.0
  %123 = vmatpush1.msra.mxu0 %v61
  %124 = vmatprep.subr.mxu0 0.0
  %125 = vmatpush1.msra.mxu0 %v62
  %126 = vmatprep.subr.mxu0 0.0
  %127 = vmatpush1.msra.mxu0 %v63
  %128 = vmatprep.subr.mxu0 0.0
  %129 = vmatpush1.msra.mxu0 %v64
  %130 = vmatprep.subr.mxu0 0.0
  %131 = vmatpush1.msra.mxu0 %v65
  %132 = vmatprep.subr.mxu0 0.0
  %133 = vmatpush1.msra.mxu0 %v66
  %134 = vmatprep.subr.mxu0 0.0
  %135 = vmatpush1.msra.mxu0 %v67
  %136 = vmatprep.mubr.f32.mxu0 %v35
  %137 = vmatmul.mubr.f32.gmra.mrb[0].mxu0 %v34
  %v138 = vpop.f32.mrb[0].mxu0
  %v139 = vadd.f32 %v71, %v138
  %v140 = vpop.f32.mrb[0].mxu0
  %141 = vdwg.mxu0
  %142 = vmatprep.subr.mxu0 0.0
  %143 = vmatpush1.msra.mxu0 %v18
  %144 = vmatprep.subr.mxu0 0.0
  %145 = vmatpush1.msra.mxu0 %v19
  %146 = vmatprep.subr.mxu0 0.0
  %147 = vmatpush1.msra.mxu0 %v20
  %148 = vmatprep.subr.mxu0 0.0
  %149 = vmatpush1.msra.mxu0 %v21
  %150 = vmatprep.subr.mxu0 0.0
  %151 = vmatpush1.msra.mxu0 %v22
  %152 = vmatprep.subr.mxu0 0.0
  %153 = vmatpush1.msra.mxu0 %v23
  %154 = vmatprep.subr.mxu0 0.0
  %155 = vmatpush1.msra.mxu0 %v24
  %156 = vmatprep.subr.mxu0 0.0
  %157 = vmatpush1.msra.mxu0 %v25
  %158 = vmatprep.subr.mxu0 0.0
  %159 = vmatpush1.msra.mxu0 %v26
  %160 = vmatprep.subr.mxu0 0.0
  %161 = vmatpush1.msra.mxu0 %v27
  %162 = vmatprep.subr.mxu0 0.0
  %163 = vmatpush1.msra.mxu0 %v28
  %164 = vmatprep.subr.mxu0 0.0
  %165 = vmatpush1.msra.mxu0 %v29
  %166 = vmatprep.subr.mxu0 0.0
  %167 = vmatpush1.msra.mxu0 %v30
  %168 = vmatprep.subr.mxu0 0.0
  %169 = vmatpush1.msra.mxu0 %v31
  %170 = vmatprep.subr.mxu0 0.0
  %171 = vmatpush1.msra.mxu0 %v32
  %172 = vmatprep.subr.mxu0 0.0
  %173 = vmatpush1.msra.mxu0 %v33
  %174 = vmatprep.subr.mxu0 0.0
  %175 = vmatpush1.msra.mxu0 0.0
  %176 = vmatprep.subr.mxu0 0.0
  %177 = vmatpush1.msra.mxu0 0.0
  %178 = vmatprep.subr.mxu0 0.0
  %179 = vmatpush1.msra.mxu0 0.0
  %180 = vmatprep.subr.mxu0 0.0
  %181 = vmatpush1.msra.mxu0 0.0
  %182 = vmatprep.subr.mxu0 0.0
  %183 = vmatpush1.msra.mxu0 0.0
  %184 = vmatprep.subr.mxu0 0.0
  %185 = vmatpush1.msra.mxu0 0.0
  %186 = vmatprep.subr.mxu0 0.0
  %187 = vmatpush1.msra.mxu0 0.0
  %188 = vmatprep.subr.mxu0 0.0
  %189 = vmatpush1.msra.mxu0 0.0
  %190 = vmatprep.subr.mxu0 0.0
  %191 = vmatpush1.msra.mxu0 0.0
  %192 = vmatprep.subr.mxu0 0.0
  %193 = vmatpush1.msra.mxu0 0.0
  %194 = vmatprep.subr.mxu0 0.0
  %195 = vmatpush1.msra.mxu0 0.0
  %196 = vmatprep.subr.mxu0 0.0
  %197 = vmatpush1.msra.mxu0 0.0
  %198 = vmatprep.subr.mxu0 0.0
  %199 = vmatpush1.msra.mxu0 0.0
  %200 = vmatprep.subr.mxu0 0.0
  %201 = vmatpush1.msra.mxu0 0.0
  %202 = vmatprep.subr.mxu0 0.0
  %203 = vmatpush1.msra.mxu0 0.0
  %204 = vmatprep.subr.mxu0 0.0
  %205 = vmatpush1.msra.mxu0 0.0
  %206 = vmatprep.mubr.f32.mxu0 0.0
  %207 = vmatmul.mubr.f32.gmra.mrb[0].mxu0 %v139
  %v208 = vpop.f32.mrb[0].mxu0
  %v209 = vadd.f32 0.0, %v208
  %v210 = vpop.f32.mrb[0].mxu0
  %211 = vdwg.mxu0
  %v212 = vsub.f32 %v139, %v209
  %v213 = vmul.f32 %v212, %v212
  %214 = vmatprep.subr.mxu0 0.0
  %215 = vmatpush1.msra.mxu0 %v18
  %216 = vmatprep.subr.mxu0 0.0
  %217 = vmatpush1.msra.mxu0 %v19
  %218 = vmatprep.subr.mxu0 0.0
  %219 = vmatpush1.msra.mxu0 %v20
  %220 = vmatprep.subr.mxu0 0.0
  %221 = vmatpush1.msra.mxu0 %v21
  %222 = vmatprep.subr.mxu0 0.0
  %223 = vmatpush1.msra.mxu0 %v22
  %224 = vmatprep.subr.mxu0 0.0
  %225 = vmatpush1.msra.mxu0 %v23
  %226 = vmatprep.subr.mxu0 0.0
  %227 = vmatpush1.msra.mxu0 %v24
  %228 = vmatprep.subr.mxu0 0.0
  %229 = vmatpush1.msra.mxu0 %v25
  %230 = vmatprep.subr.mxu0 0.0
  %231 = vmatpush1.msra.mxu0 %v26
  %232 = vmatprep.subr.mxu0 0.0
  %233 = vmatpush1.msra.mxu0 %v27
  %234 = vmatprep.subr.mxu0 0.0
  %235 = vmatpush1.msra.mxu0 %v28
  %236 = vmatprep.subr.mxu0 0.0
  %237 = vmatpush1.msra.mxu0 %v29
  %238 = vmatprep.subr.mxu0 0.0
  %239 = vmatpush1.msra.mxu0 %v30
  %240 = vmatprep.subr.mxu0 0.0
  %241 = vmatpush1.msra.mxu0 %v31
  %242 = vmatprep.subr.mxu0 0.0
  %243 = vmatpush1.msra.mxu0 %v32
  %244 = vmatprep.subr.mxu0 0.0
  %245 = vmatpush1.msra.mxu0 %v33
  %246 = vmatprep.subr.mxu0 0.0
  %247 = vmatpush1.msra.mxu0 0.0
  %248 = vmatprep.subr.mxu0 0.0
  %249 = vmatpush1.msra.mxu0 0.0
  %250 = vmatprep.subr.mxu0 0.0
  %251 = vmatpush1.msra.mxu0 0.0
  %252 = vmatprep.subr.mxu0 0.0
  %253 = vmatpush1.msra.mxu0 0.0
  %254 = vmatprep.subr.mxu0 0.0
  %255 = vmatpush1.msra.mxu0 0.0
  %256 = vmatprep.subr.mxu0 0.0
  %257 = vmatpush1.msra.mxu0 0.0
  %258 = vmatprep.subr.mxu0 0.0
  %259 = vmatpush1.msra.mxu0 0.0
  %260 = vmatprep.subr.mxu0 0.0
  %261 = vmatpush1.msra.mxu0 0.0
  %262 = vmatprep.subr.mxu0 0.0
  %263 = vmatpush1.msra.mxu0 0.0
  %264 = vmatprep.subr.mxu0 0.0
  %265 = vmatpush1.msra.mxu0 0.0
  %266 = vmatprep.subr.mxu0 0.0
  %267 = vmatpush1.msra.mxu0 0.0
  %268 = vmatprep.subr.mxu0 0.0
  %269 = vmatpush1.msra.mxu0 0.0
  %270 = vmatprep.subr.mxu0 0.0
  %271 = vmatpush1.msra.mxu0 0.0
  %272 = vmatprep.subr.mxu0 0.0
  %273 = vmatpush1.msra.mxu0 0.0
  %274 = vmatprep.subr.mxu0 0.0
  %275 = vmatpush1.msra.mxu0 0.0
  %276 = vmatprep.subr.mxu0 0.0
  %277 = vmatpush1.msra.mxu0 0.0
  %278 = vmatprep.mubr.f32.mxu0 0.0
  %279 = vmatmul.mubr.f32.gmra.mrb[0].mxu0 %v213
  %v280 = vpop.f32.mrb[0].mxu0
  %v281 = vadd.f32 1e-05, %v280
  %v282 = vpop.f32.mrb[0].mxu0
  %283 = vdwg.mxu0
  %v284 = vrsqrt.pop %v281
  %v285 = vmul.f32 %v212, %v284
  %v286 = vlaneseq
  %v287 = vshrl.u32 %v286, 7
  %v288 = vsub.s32 1, %v287
  %v289 = vrot.slane %v17, %v288
  %v290 = vmul.f32 %v285, %v289
  %v291 = vlaneseq
  %v292 = vshrl.u32 %v291, 7
  %v293 = vsub.s32 2, %v292
  %v294 = vrot.slane %v17, %v293
  %v295 = vadd.f32 %v290, %v294
  %296 = vst [vmem:[%s4] sm:$0xff] %v295
  // Predicated region
  $region18: #{patch_embedding.1} parent=0 // pred_check
    _
  $region19: #{patch_embedding.1} parent=0 // pred_check_branch
    %298 = sbr.rel (0) target = $region21
  $region20: #{patch_embedding.1} parent=0 // pred_region
    _
  $region21: #{patch_embedding.1} parent=0 // pred_fallthru
    _
  // Predicated region
  $region22: #{patch_embedding.1} parent=0 // pred_check
    _
  $region23: #{patch_embedding.1} parent=0 // pred_check_branch
    %300 = sbr.rel (0) target = $region25
  $region24: #{patch_embedding.1} parent=0 // pred_region
    _
  $region25: #{patch_embedding.1} parent=0 // pred_fallthru
    _

</llo_original>
